<compile_context>
chip_gen: v6e
topology: v6e:2x2x1
jax: 0.10.0
libtpu: 0.0.40
codegen_flags: <defaults>
</compile_context>

<pallas_src>
import functools

import jax
import jax.numpy as jnp
from jax.experimental import pallas as pl
from jax.experimental.pallas import tpu as pltpu

BN_EPS = 1e-5
LANE = 128


# ----------------------------------------------------------------------------
# Fused kernel: the whole network as a static unrolled chain of
#   h = h @ W + b ; optional ReLU
# (BN already folded, risk heads already batched at parameter-prep time.)
# ----------------------------------------------------------------------------
def _fused_net_kernel(x_ref, *args, relu_flags):
    o_ref = args[-1]
    wb_refs = args[:-1]
    h = x_ref[...].astype(jnp.float32)
    for i, relu in enumerate(relu_flags):
        w = wb_refs[2 * i][...]
        b = wb_refs[2 * i + 1][...]          # (1, out) broadcast, no materialize
        h = jnp.dot(h, w, preferred_element_type=jnp.float32) + b
        if relu:
            h = jnp.maximum(h, 0.0)
    o_ref[...] = h.astype(o_ref.dtype)


def fused_net_forward(x, layers, *, block_batch=512):
    """Run the fused network.

    layers: list of (W, b, relu) with W:(in,out) f32, b:(1,out) f32.
    Returns (batch, out_width_of_last_layer) float32.
    """
    batch, in_f = x.shape
    out_f = layers[-1][0].shape[1]

    # Batch tiling: one 'parallel' grid axis over row tiles; weights resident.
    if batch <= block_batch:
        bm = batch
        padded_batch = batch
    else:
        bm = block_batch                          # multiple of 8
        padded_batch = pl.cdiv(batch, bm) * bm
        if padded_batch != batch:
            x = jnp.pad(x, ((0, padded_batch - batch), (0, 0)))
    grid = (padded_batch // bm,)

    in_specs = [pl.BlockSpec((bm, in_f), lambda i: (i, 0))]
    flat_args = [x]
    for (w, b, _) in layers:
        in_specs.append(pl.BlockSpec(w.shape, lambda i: (0, 0)))   # resident
        in_specs.append(pl.BlockSpec(b.shape, lambda i: (0, 0)))   # resident
        flat_args += [w, b]

    kernel = functools.partial(
        _fused_net_kernel,
        relu_flags=tuple(bool(relu) for (_, _, relu) in layers))

    out = pl.pallas_call(
        kernel,
        out_shape=jax.ShapeDtypeStruct((padded_batch, out_f), jnp.float32),
        grid=grid,
        in_specs=in_specs,
        out_specs=pl.BlockSpec((bm, out_f), lambda i: (i, 0)),
        compiler_params=pltpu.CompilerParams(
            dimension_semantics=("parallel",)),   # shard batch tiles on v7x 2xTC
    )(*flat_args)
    return out[:batch]


# ----------------------------------------------------------------------------
# Parameter construction (deterministic, synthetic; PyTorch-like layout)
# ----------------------------------------------------------------------------
def _init_linear(key, in_f, out_f):
    kw, kb = jax.random.split(key)
    # Weight stored as (in, out) = W_pytorch.T so the kernel computes x @ W + b.
    w = jax.random.normal(kw, (in_f, out_f), jnp.float32) * jnp.sqrt(2.0 / in_f)
    b = jax.random.normal(kb, (1, out_f), jnp.float32) * 0.01
    return w, b


def _init_bn(key, out_f):
    # Non-trivial running stats / affine params so the BN folding is exercised.
    km, kv, kg, kb = jax.random.split(key, 4)
    mean = 0.1 * jax.random.normal(km, (out_f,), jnp.float32)
    var = 1.0 + 0.1 * jnp.abs(jax.random.normal(kv, (out_f,), jnp.float32))
    gamma = 1.0 + 0.1 * jax.random.normal(kg, (out_f,), jnp.float32)
    beta = 0.1 * jax.random.normal(kb, (out_f,), jnp.float32)
    return mean, var, gamma, beta


def init_mlp_vanilla(key, in_features, num_nodes, out_features):
    """torchtuples MLPVanilla: [Linear->ReLU->BN]* over num_nodes, then Linear."""
    dims = [in_features] + list(num_nodes)
    keys = jax.random.split(key, 2 * len(num_nodes) + 1)
    hidden = []
    for i in range(len(num_nodes)):
        w, b = _init_linear(keys[2 * i], dims[i], dims[i + 1])
        bn = _init_bn(keys[2 * i + 1], dims[i + 1])
        hidden.append((w, b, bn))
    out = _init_linear(keys[-1], dims[-1], out_features)
    return hidden, out


def init_cause_specific_net(key, in_features, num_nodes_shared,
                            num_nodes_indiv, num_risks, out_features):
    k_shared, k_risks = jax.random.split(key)
    shared = init_mlp_vanilla(k_shared, in_features,
                              num_nodes_shared[:-1], num_nodes_shared[-1])
    risk_keys = jax.random.split(k_risks, num_risks)
    risks = [init_mlp_vanilla(rk, num_nodes_shared[-1], num_nodes_indiv,
                              out_features) for rk in risk_keys]
    return shared, risks


# ----------------------------------------------------------------------------
# Pure-JAX reference (unfused, unfolded) for correctness checking
# ----------------------------------------------------------------------------
def _mlp_reference(x, mlp):
    hidden, (w_out, b_out) = mlp
    h = x
    for (w, b, (mean, var, gamma, beta)) in hidden:
        h = jnp.maximum(h @ w + b, 0.0)
        h = (h - mean) * jax.lax.rsqrt(var + BN_EPS) * gamma + beta
    return h @ w_out + b_out


def cause_specific_net_reference(x, shared, risks):
    s = _mlp_reference(x, shared)
    return jnp.stack([_mlp_reference(s, r) for r in risks], axis=1)


# ----------------------------------------------------------------------------
# Parameter prep: fold BN -> batch risk heads -> lane-pad
# ----------------------------------------------------------------------------
def _fold_bn_into_next(mlp):
    """Fold eval-mode BN of each hidden block into the FOLLOWING Linear.
    Returns a list of plain dense layers (W, b, relu)."""
    hidden, (w_out, b_out) = mlp
    layers = []
    scale = shift = None
    for (w, b, (mean, var, gamma, beta)) in hidden:
        if scale is not None:
            b = b + shift @ w              # uses original w
            w = scale[:, None] * w
        layers.append((w, b, True))
        s = gamma * jax.lax.rsqrt(var + BN_EPS)
        scale, shift = s, beta - mean * s
    if scale is not None:
        b_out = b_out + shift @ w_out
        w_out = scale[:, None] * w_out
    layers.append((w_out, b_out, False))
    return layers


def _block_diag(mats):
    rows = sum(m.shape[0] for m in mats)
    cols = sum(m.shape[1] for m in mats)
    out = jnp.zeros((rows, cols), mats[0].dtype)
    r = c = 0
    for m in mats:
        out = out.at[r:r + m.shape[0], c:c + m.shape[1]].set(m)
        r += m.shape[0]
        c += m.shape[1]
    return out


def _batch_risk_heads(risk_layer_lists):
    """Merge per-risk head chains into one wide chain: layer 0 concatenated
    along the output axis, deeper layers block-diagonal."""
    fused = []
    n_layers = len(risk_layer_lists[0])
    for j in range(n_layers):
        ws = [rl[j][0] for rl in risk_layer_lists]
        bs = [rl[j][1] for rl in risk_layer_lists]
        relu = risk_layer_lists[0][j][2]
        w = jnp.concatenate(ws, axis=1) if j == 0 else _block_diag(ws)
        b = jnp.concatenate(bs, axis=1)
        fused.append((w, b, relu))
    return fused


def _round_up(n, m):
    return ((n + m - 1) // m) * m


def _pad_lane_dense(layers, lane=LANE):
    """Zero-pad every layer's output width (and the matching next-layer input
    rows) to a multiple of `lane` -> full-width (unmasked) vector stores.
    The first layer's input width is left untouched (matches real x)."""
    padded = []
    prev_out_pad = None
    for (w, b, relu) in layers:
        in_f, out_f = w.shape
        in_pad = in_f if prev_out_pad is None else prev_out_pad
        out_pad = _round_up(out_f, lane)
        w_p = jnp.zeros((in_pad, out_pad), w.dtype).at[:in_f, :out_f].set(w)
        b_p = jnp.zeros((1, out_pad), b.dtype).at[:, :out_f].set(b)
        padded.append((w_p, b_p, relu))
        prev_out_pad = out_pad
    return padded


def build_fused_layers(shared, risks):
    shared_layers = _fold_bn_into_next(shared)
    risk_layers = _batch_risk_heads([_fold_bn_into_next(r) for r in risks])
    return _pad_lane_dense(shared_layers + risk_layers)


def cause_specific_net_forward(x, fused_layers, num_risks, out_features):
    y = fused_net_forward(x, fused_layers)          # (batch, pad(R*out))
    y = y[:, :num_risks * out_features]             # strip lane padding
    return y.reshape(x.shape[0], num_risks, out_features)


# ----------------------------------------------------------------------------
if __name__ == "__main__":
    in_features = 16
    num_nodes_shared = [32, 32]   # hidden=[32], shared output dim = 32
    num_nodes_indiv = [32]
    num_risks = 2
    out_features = 8
    batch = 8

    key = jax.random.PRNGKey(0)
    k_params, k_x = jax.random.split(key)

    shared, risks = init_cause_specific_net(
        k_params, in_features, num_nodes_shared, num_nodes_indiv,
        num_risks, out_features)
    fused_layers = build_fused_layers(shared, risks)

    x = jax.random.normal(k_x, (batch, in_features), jnp.float32)

    out = cause_specific_net_forward(x, fused_layers, num_risks, out_features)
    out = jax.block_until_ready(out)

    assert out.shape == (batch, num_risks, out_features), out.shape
    assert out.dtype == jnp.float32

    ref = cause_specific_net_reference(x, shared, risks)
    max_err = float(jnp.max(jnp.abs(out - ref)))
    assert max_err < 5e-3, f"max abs error vs reference: {max_err}"

    print("KERNEL_OK")
</pallas_src>

<mosaic_0001>
module attributes {stable_mosaic.version = 11 : i64} {
  func.func @_fused_net_kernel(%arg0: i32, %arg1: memref<8x16xf32, #tpu.memory_space<vmem>>, %arg2: memref<16x128xf32, #tpu.memory_space<vmem>>, %arg3: memref<1x128xf32, #tpu.memory_space<vmem>>, %arg4: memref<128x128xf32, #tpu.memory_space<vmem>>, %arg5: memref<1x128xf32, #tpu.memory_space<vmem>>, %arg6: memref<128x128xf32, #tpu.memory_space<vmem>>, %arg7: memref<1x128xf32, #tpu.memory_space<vmem>>, %arg8: memref<128x128xf32, #tpu.memory_space<vmem>>, %arg9: memref<1x128xf32, #tpu.memory_space<vmem>>, %arg10: memref<8x128xf32, #tpu.memory_space<vmem>>) attributes {dimension_semantics = [#tpu.dimension_semantics<parallel>], iteration_bounds = array<i64: 1>, scalar_prefetch = 0 : i64, scratch_operands = 0 : i64, tpu.core_type = #tpu.core_type<tc>, window_params = [{transform_indices = @transform_0, window_bounds = array<i64: 8, 16>}, {pipeline_mode = #tpu.pipeline_mode<synchronous>, transform_indices = @transform_1, window_bounds = array<i64: 16, 128>}, {pipeline_mode = #tpu.pipeline_mode<synchronous>, transform_indices = @transform_2, window_bounds = array<i64: 1, 128>}, {pipeline_mode = #tpu.pipeline_mode<synchronous>, transform_indices = @transform_3, window_bounds = array<i64: 128, 128>}, {pipeline_mode = #tpu.pipeline_mode<synchronous>, transform_indices = @transform_4, window_bounds = array<i64: 1, 128>}, {pipeline_mode = #tpu.pipeline_mode<synchronous>, transform_indices = @transform_5, window_bounds = array<i64: 128, 128>}, {pipeline_mode = #tpu.pipeline_mode<synchronous>, transform_indices = @transform_6, window_bounds = array<i64: 1, 128>}, {pipeline_mode = #tpu.pipeline_mode<synchronous>, transform_indices = @transform_7, window_bounds = array<i64: 128, 128>}, {pipeline_mode = #tpu.pipeline_mode<synchronous>, transform_indices = @transform_8, window_bounds = array<i64: 1, 128>}, {transform_indices = @transform_9, window_bounds = array<i64: 8, 128>}]} {
    %c0 = arith.constant 0 : index
    %c0_0 = arith.constant 0 : index
    %0 = vector.load %arg1[%c0, %c0_0] : memref<8x16xf32, #tpu.memory_space<vmem>>, vector<8x16xf32>
    %c0_1 = arith.constant 0 : index
    %c0_2 = arith.constant 0 : index
    %1 = vector.load %arg2[%c0_1, %c0_2] : memref<16x128xf32, #tpu.memory_space<vmem>>, vector<16x128xf32>
    %c0_3 = arith.constant 0 : index
    %c0_4 = arith.constant 0 : index
    %2 = vector.load %arg3[%c0_3, %c0_4] : memref<1x128xf32, #tpu.memory_space<vmem>>, vector<1x128xf32>
    %cst = arith.constant dense<0.000000e+00> : vector<8x128xf32>
    %3 = tpu.matmul %0, %1, %cst {dimension_numbers = #tpu.dot_dimension_numbers<[1], [0], [0], [1], [0, 0, 1, 1], [], []>} : vector<8x16xf32>, vector<16x128xf32>, vector<8x128xf32> -> vector<8x128xf32>
    %4 = vector.broadcast %2 : vector<1x128xf32> to vector<8x128xf32>
    %5 = arith.addf %3, %4 : vector<8x128xf32>
    %cst_5 = arith.constant 0.000000e+00 : f32
    %6 = vector.broadcast %cst_5 : f32 to vector<8x128xf32>
    %7 = arith.maximumf %5, %6 : vector<8x128xf32>
    %c0_6 = arith.constant 0 : index
    %c0_7 = arith.constant 0 : index
    %8 = vector.load %arg4[%c0_6, %c0_7] : memref<128x128xf32, #tpu.memory_space<vmem>>, vector<128x128xf32>
    %c0_8 = arith.constant 0 : index
    %c0_9 = arith.constant 0 : index
    %9 = vector.load %arg5[%c0_8, %c0_9] : memref<1x128xf32, #tpu.memory_space<vmem>>, vector<1x128xf32>
    %cst_10 = arith.constant dense<0.000000e+00> : vector<8x128xf32>
    %10 = tpu.matmul %7, %8, %cst_10 {dimension_numbers = #tpu.dot_dimension_numbers<[1], [0], [0], [1], [0, 0, 1, 1], [], []>} : vector<8x128xf32>, vector<128x128xf32>, vector<8x128xf32> -> vector<8x128xf32>
    %11 = vector.broadcast %9 : vector<1x128xf32> to vector<8x128xf32>
    %12 = arith.addf %10, %11 : vector<8x128xf32>
    %c0_11 = arith.constant 0 : index
    %c0_12 = arith.constant 0 : index
    %13 = vector.load %arg6[%c0_11, %c0_12] : memref<128x128xf32, #tpu.memory_space<vmem>>, vector<128x128xf32>
    %c0_13 = arith.constant 0 : index
    %c0_14 = arith.constant 0 : index
    %14 = vector.load %arg7[%c0_13, %c0_14] : memref<1x128xf32, #tpu.memory_space<vmem>>, vector<1x128xf32>
    %cst_15 = arith.constant dense<0.000000e+00> : vector<8x128xf32>
    %15 = tpu.matmul %12, %13, %cst_15 {dimension_numbers = #tpu.dot_dimension_numbers<[1], [0], [0], [1], [0, 0, 1, 1], [], []>} : vector<8x128xf32>, vector<128x128xf32>, vector<8x128xf32> -> vector<8x128xf32>
    %16 = vector.broadcast %14 : vector<1x128xf32> to vector<8x128xf32>
    %17 = arith.addf %15, %16 : vector<8x128xf32>
    %cst_16 = arith.constant 0.000000e+00 : f32
    %18 = vector.broadcast %cst_16 : f32 to vector<8x128xf32>
    %19 = arith.maximumf %17, %18 : vector<8x128xf32>
    %c0_17 = arith.constant 0 : index
    %c0_18 = arith.constant 0 : index
    %20 = vector.load %arg8[%c0_17, %c0_18] : memref<128x128xf32, #tpu.memory_space<vmem>>, vector<128x128xf32>
    %c0_19 = arith.constant 0 : index
    %c0_20 = arith.constant 0 : index
    %21 = vector.load %arg9[%c0_19, %c0_20] : memref<1x128xf32, #tpu.memory_space<vmem>>, vector<1x128xf32>
    %cst_21 = arith.constant dense<0.000000e+00> : vector<8x128xf32>
    %22 = tpu.matmul %19, %20, %cst_21 {dimension_numbers = #tpu.dot_dimension_numbers<[1], [0], [0], [1], [0, 0, 1, 1], [], []>} : vector<8x128xf32>, vector<128x128xf32>, vector<8x128xf32> -> vector<8x128xf32>
    %23 = vector.broadcast %21 : vector<1x128xf32> to vector<8x128xf32>
    %24 = arith.addf %22, %23 : vector<8x128xf32>
    %c0_22 = arith.constant 0 : index
    %c0_23 = arith.constant 0 : index
    %25 = vector.load %arg10[%c0_22, %c0_23] : memref<8x128xf32, #tpu.memory_space<vmem>>, vector<8x128xf32>
    tpu.vector_store %arg10[%c0_22, %c0_23], %24 {strides = array<i32>} : memref<8x128xf32, #tpu.memory_space<vmem>>, vector<8x128xf32>,
    return
  }
  func.func @transform_0(%arg0: i32) -> (i32, i32) {
    %c0_i32 = arith.constant 0 : i32
    %c0_i32_0 = arith.constant 0 : i32
    return %arg0, %c0_i32 : i32, i32
  }
  func.func @transform_1(%arg0: i32) -> (i32, i32) {
    %c0_i32 = arith.constant 0 : i32
    %c0_i32_0 = arith.constant 0 : i32
    %c0_i32_1 = arith.constant 0 : i32
    return %c0_i32, %c0_i32_0 : i32, i32
  }
  func.func @transform_2(%arg0: i32) -> (i32, i32) {
    %c0_i32 = arith.constant 0 : i32
    %c0_i32_0 = arith.constant 0 : i32
    %c0_i32_1 = arith.constant 0 : i32
    return %c0_i32, %c0_i32_0 : i32, i32
  }
  func.func @transform_3(%arg0: i32) -> (i32, i32) {
    %c0_i32 = arith.constant 0 : i32
    %c0_i32_0 = arith.constant 0 : i32
    %c0_i32_1 = arith.constant 0 : i32
    return %c0_i32, %c0_i32_0 : i32, i32
  }
  func.func @transform_4(%arg0: i32) -> (i32, i32) {
    %c0_i32 = arith.constant 0 : i32
    %c0_i32_0 = arith.constant 0 : i32
    %c0_i32_1 = arith.constant 0 : i32
    return %c0_i32, %c0_i32_0 : i32, i32
  }
  func.func @transform_5(%arg0: i32) -> (i32, i32) {
    %c0_i32 = arith.constant 0 : i32
    %c0_i32_0 = arith.constant 0 : i32
    %c0_i32_1 = arith.constant 0 : i32
    return %c0_i32, %c0_i32_0 : i32, i32
  }
  func.func @transform_6(%arg0: i32) -> (i32, i32) {
    %c0_i32 = arith.constant 0 : i32
    %c0_i32_0 = arith.constant 0 : i32
    %c0_i32_1 = arith.constant 0 : i32
    return %c0_i32, %c0_i32_0 : i32, i32
  }
  func.func @transform_7(%arg0: i32) -> (i32, i32) {
    %c0_i32 = arith.constant 0 : i32
    %c0_i32_0 = arith.constant 0 : i32
    %c0_i32_1 = arith.constant 0 : i32
    return %c0_i32, %c0_i32_0 : i32, i32
  }
  func.func @transform_8(%arg0: i32) -> (i32, i32) {
    %c0_i32 = arith.constant 0 : i32
    %c0_i32_0 = arith.constant 0 : i32
    %c0_i32_1 = arith.constant 0 : i32
    return %c0_i32, %c0_i32_0 : i32, i32
  }
  func.func @transform_9(%arg0: i32) -> (i32, i32) {
    %c0_i32 = arith.constant 0 : i32
    %c0_i32_0 = arith.constant 0 : i32
    return %arg0, %c0_i32 : i32, i32
  }
}

</mosaic_0001>

<llo_original>
// kernel: tpu_custom_call.1
$region0: #{tpu_custom_call.1}
  #allocation0 [shape = 'u32[]', space=smem, size = 0x4, offset = 0x4, fixed_abs, tag = 'smem constant byte address 0x4 - core index']
  #allocation1 [shape = 'u32[144,128]{1,0:T(1,128)}', space=vmem, size = 0x12000, scoped, tag = 'internal scratch']
  %s0 = inlined_call_operand.hbm [shape: f32[8,16], index: 0, kind: input, shape index: {}]
  %s1 = inlined_call_operand.hbm [shape: f32[16,128], index: 1, kind: input, shape index: {}]
  %s2 = inlined_call_operand.vmem [shape: f32[1,128], index: 2, kind: input, shape index: {}]
  %s3 = inlined_call_operand.hbm [shape: f32[128,128], index: 3, kind: input, shape index: {}]
  %s4 = inlined_call_operand.vmem [shape: f32[1,128], index: 4, kind: input, shape index: {}]
  %s5 = inlined_call_operand.hbm [shape: f32[128,128], index: 5, kind: input, shape index: {}]
  %s6 = inlined_call_operand.vmem [shape: f32[1,128], index: 6, kind: input, shape index: {}]
  %s7 = inlined_call_operand.hbm [shape: f32[128,128], index: 7, kind: input, shape index: {}]
  %s8 = inlined_call_operand.vmem [shape: f32[1,128], index: 8, kind: input, shape index: {}]
  %s9 = inlined_call_operand.hbm [shape: f32[8,128], index: 9, kind: output, shape index: {}]
  %s10 = sld [smem:[#allocation0]]
  $region66: #{tpu_custom_call.1} parent=0
    _
  %s12 = ssub.s32 1, %s10
  %s13 = scalar_select 0, %s12, %s10
  $region1: #{tpu_custom_call.1} parent=0
    #allocation2 [shape = 'u8[4096]{0}', space=vmem, size = 0x1000, scoped, tag = 'input window, operand 0, single buffered']
    #allocation3 [shape = 's32[1]{0}', space=sflag, size = 0x4, scoped, tag = 'scoped memory for tpu_custom_call.1']
    #allocation4 [shape = 's32[1]{0}', space=sflag, size = 0x4, scoped, tag = 'scoped memory for tpu_custom_call.1']
    #allocation5 [shape = 'u8[8192]{0}', space=vmem, size = 0x2000, scoped, tag = 'input window, operand 1, single buffered']
    #allocation6 [shape = 's32[1]{0}', space=sflag, size = 0x4, scoped, tag = 'scoped memory for tpu_custom_call.1']
    #allocation7 [shape = 'u8[65536]{0}', space=vmem, size = 0x10000, scoped, tag = 'input window, operand 3, single buffered']
    #allocation8 [shape = 'u8[65536]{0}', space=vmem, size = 0x10000, scoped, tag = 'input window, operand 5, single buffered']
    #allocation9 [shape = 's32[1]{0}', space=sflag, size = 0x4, scoped, tag = 'scoped memory for tpu_custom_call.1']
    #allocation10 [shape = 'u8[65536]{0}', space=vmem, size = 0x10000, scoped, tag = 'input window, operand 7, single buffered']
    #allocation11 [shape = 'u8[4096]{0}', space=vmem, size = 0x1000, scoped, tag = 'output window, operand 0, single buffered']
    %14 = vsyncpa [#allocation3], 0
    %15 = vsyncpa [#allocation6], 0
    %16 = vsyncpa [#allocation9], 0
    %17 = vsyncpa [#allocation4], 0
    // Predicated region
    $region2: #{tpu_custom_call.1} parent=1 // pred_check
      _
    $region3: #{tpu_custom_call.1} parent=1 // pred_check_branch
      %19 = sbr.rel (0) target = $region5
    $region4: #{tpu_custom_call.1} parent=1 // pred_region
      %s21 = ssub.s32 128, 128
      %22 = vsyncadd [#allocation3], %s21
      %s24 = sshll.u32 [#allocation2], 4
      %s25 = int_to_ptr.vmem [resolvable:$true] %s24
      %27 = dma.hbm_to_vmem [thread:$0]  %s0, 128, %s25, [#allocation3]
    $region5: #{tpu_custom_call.1} parent=1 // pred_fallthru
      _
    // Predicated region
    $region6: #{tpu_custom_call.1} parent=1 // pred_check
      _
    $region7: #{tpu_custom_call.1} parent=1 // pred_check_branch
      %29 = sbr.rel (0) target = $region9
    $region8: #{tpu_custom_call.1} parent=1 // pred_region
      %s31 = ssub.s32 256, 256
      %32 = vsyncadd [#allocation6], %s31
      %s33 = sshll.u32 [#allocation5], 4
      %s34 = int_to_ptr.vmem [resolvable:$true] %s33
      %39 = dma.hbm_to_vmem [thread:$0]  %s1, 256, %s34, [#allocation6], 128, 128, 8
    $region9: #{tpu_custom_call.1} parent=1 // pred_fallthru
      _
    // Predicated region
    $region10: #{tpu_custom_call.1} parent=1 // pred_check
      _
    $region11: #{tpu_custom_call.1} parent=1 // pred_check_branch
      %41 = sbr.rel (0) target = $region13
    $region12: #{tpu_custom_call.1} parent=1 // pred_region
      _
    $region13: #{tpu_custom_call.1} parent=1 // pred_fallthru
      _
    // Predicated region
    $region14: #{tpu_custom_call.1} parent=1 // pred_check
      _
    $region15: #{tpu_custom_call.1} parent=1 // pred_check_branch
      %43 = sbr.rel (0) target = $region17
    $region16: #{tpu_custom_call.1} parent=1 // pred_region
      %s45 = ssub.s32 2048, 2048
      %46 = vsyncadd [#allocation6], %s45
      %s47 = sshll.u32 [#allocation7], 4
      %s48 = int_to_ptr.vmem [resolvable:$true] %s47
      %53 = dma.hbm_to_vmem [thread:$0]  %s3, 2048, %s48, [#allocation6], 128, 128, 8
    $region17: #{tpu_custom_call.1} parent=1 // pred_fallthru
      _
    // Predicated region
    $region18: #{tpu_custom_call.1} parent=1 // pred_check
      _
    $region19: #{tpu_custom_call.1} parent=1 // pred_check_branch
      %55 = sbr.rel (0) target = $region21
    $region20: #{tpu_custom_call.1} parent=1 // pred_region
      _
    $region21: #{tpu_custom_call.1} parent=1 // pred_fallthru
      _
    // Predicated region
    $region22: #{tpu_custom_call.1} parent=1 // pred_check
      _
    $region23: #{tpu_custom_call.1} parent=1 // pred_check_branch
      %57 = sbr.rel (0) target = $region25
    $region24: #{tpu_custom_call.1} parent=1 // pred_region
      %s59 = ssub.s32 2048, 2048
      %60 = vsyncadd [#allocation9], %s59
      %s61 = sshll.u32 [#allocation8], 4
      %s62 = int_to_ptr.vmem [resolvable:$true] %s61
      %67 = dma.hbm_to_vmem [thread:$0]  %s5, 2048, %s62, [#allocation9], 128, 128, 8
    $region25: #{tpu_custom_call.1} parent=1 // pred_fallthru
      _
    // Predicated region
    $region26: #{tpu_custom_call.1} parent=1 // pred_check
      _
    $region27: #{tpu_custom_call.1} parent=1 // pred_check_branch
      %69 = sbr.rel (0) target = $region29
    $region28: #{tpu_custom_call.1} parent=1 // pred_region
      _
    $region29: #{tpu_custom_call.1} parent=1 // pred_fallthru
      _
    // Predicated region
    $region30: #{tpu_custom_call.1} parent=1 // pred_check
      _
    $region31: #{tpu_custom_call.1} parent=1 // pred_check_branch
      %71 = sbr.rel (0) target = $region33
    $region32: #{tpu_custom_call.1} parent=1 // pred_region
      %s73 = ssub.s32 2048, 2048
      %74 = vsyncadd [#allocation9], %s73
      %s75 = sshll.u32 [#allocation10], 4
      %s76 = int_to_ptr.vmem [resolvable:$true] %s75
      %81 = dma.hbm_to_vmem [thread:$0]  %s7, 2048, %s76, [#allocation9], 128, 128, 8
    $region33: #{tpu_custom_call.1} parent=1 // pred_fallthru
      _
    // Predicated region
    $region34: #{tpu_custom_call.1} parent=1 // pred_check
      _
    $region35: #{tpu_custom_call.1} parent=1 // pred_check_branch
      %83 = sbr.rel (0) target = $region37
    $region36: #{tpu_custom_call.1} parent=1 // pred_region
      _
    $region37: #{tpu_custom_call.1} parent=1 // pred_fallthru
      _
    // Predicated region
    $region38: #{tpu_custom_call.1} parent=1 // pred_check
      _
    $region39: #{tpu_custom_call.1} parent=1 // pred_check_branch
      %85 = sbr.rel (0) target = $region41
    $region40: #{tpu_custom_call.1} parent=1 // pred_region
      %86 = dma.done [#allocation3], 128
    $region41: #{tpu_custom_call.1} parent=1 // pred_fallthru
      _
    // Predicated region
    $region42: #{tpu_custom_call.1} parent=1 // pred_check
      _
    $region43: #{tpu_custom_call.1} parent=1 // pred_check_branch
      %88 = sbr.rel (0) target = $region45
    $region44: #{tpu_custom_call.1} parent=1 // pred_region
      %89 = dma.done [#allocation6], 256
    $region45: #{tpu_custom_call.1} parent=1 // pred_fallthru
      _
    // Predicated region
    $region46: #{tpu_custom_call.1} parent=1 // pred_check
      _
    $region47: #{tpu_custom_call.1} parent=1 // pred_check_branch
      %91 = sbr.rel (0) target = $region49
    $region48: #{tpu_custom_call.1} parent=1 // pred_region
      %92 = dma.done [#allocation6], 2048
    $region49: #{tpu_custom_call.1} parent=1 // pred_fallthru
      _
    // Predicated region
    $region50: #{tpu_custom_call.1} parent=1 // pred_check
      _
    $region51: #{tpu_custom_call.1} parent=1 // pred_check_branch
      %94 = sbr.rel (0) target = $region53
    $region52: #{tpu_custom_call.1} parent=1 // pred_region
      %95 = dma.done [#allocation9], 2048
    $region53: #{tpu_custom_call.1} parent=1 // pred_fallthru
      _
    // Predicated region
    $region54: #{tpu_custom_call.1} parent=1 // pred_check
      _
    $region55: #{tpu_custom_call.1} parent=1 // pred_check_branch
      %97 = sbr.rel (0) target = $region57
    $region56: #{tpu_custom_call.1} parent=1 // pred_region
      %98 = dma.done [#allocation9], 2048
    $region57: #{tpu_custom_call.1} parent=1 // pred_fallthru
      _
    %v99 = vld [vmem:[#allocation2] sm:$0xff]
    %v100 = vld [vmem:[#allocation5] sm:$0xff]
    %v101 = vld [vmem:[#allocation5 + $0x8] sm:$0xff]
    %v102 = vld [vmem:[%s2] sm:$0x1]
    %v104 = vlaneseq
    %v105 = vshrl.u32 %v104, 7
    %v106 = vsub.s32 0, %v105
    %v107 = vrot.slane %v102, %v106
    %vm109 = vcmask 130048
    %v111 = vsel %vm109, %v99, 0
    %113 = vmatprep.subr.mxu0 0.0
    %114 = vmatpush1.msra.mxu0 0.0
    %115 = vmatprep.subr.mxu0 0.0
    %116 = vmatpush1.msra.mxu0 0.0
    %117 = vmatprep.subr.mxu0 0.0
    %118 = vmatpush1.msra.mxu0 0.0
    %119 = vmatprep.subr.mxu0 0.0
    %120 = vmatpush1.msra.mxu0 0.0
    %121 = vmatprep.subr.mxu0 0.0
    %122 = vmatpush1.msra.mxu0 0.0
    %123 = vmatprep.subr.mxu0 0.0
    %124 = vmatpush1.msra.mxu0 0.0
    %125 = vmatprep.subr.mxu0 0.0
    %126 = vmatpush1.msra.mxu0 0.0
    %127 = vmatprep.subr.mxu0 0.0
    %128 = vmatpush1.msra.mxu0 0.0
    %129 = vmatprep.subr.mxu0 0.0
    %130 = vmatpush1.msra.mxu0 0.0
    %131 = vmatprep.subr.mxu0 0.0
    %132 = vmatpush1.msra.mxu0 0.0
    %133 = vmatprep.subr.mxu0 0.0
    %134 = vmatpush1.msra.mxu0 0.0
    %135 = vmatprep.subr.mxu0 0.0
    %136 = vmatpush1.msra.mxu0 0.0
    %137 = vmatprep.subr.mxu0 0.0
    %138 = vmatpush1.msra.mxu0 0.0
    %139 = vmatprep.subr.mxu0 0.0
    %140 = vmatpush1.msra.mxu0 0.0
    %141 = vmatprep.subr.mxu0 0.0
    %142 = vmatpush1.msra.mxu0 %v101
    %143 = vmatprep.subr.mxu0 0.0
    %144 = vmatpush1.msra.mxu0 %v100
    %145 = vmatprep.subr.mxu0 0.0
    %146 = vmatpush2.msra.mxu0 0.0
    %147 = vmatprep.subr.mxu0 0.0
    %148 = vmatpush2.msra.mxu0 0.0
    %149 = vmatprep.subr.mxu0 0.0
    %150 = vmatpush2.msra.mxu0 0.0
    %151 = vmatprep.subr.mxu0 0.0
    %152 = vmatpush2.msra.mxu0 0.0
    %153 = vmatprep.subr.mxu0 0.0
    %154 = vmatpush2.msra.mxu0 0.0
    %155 = vmatprep.subr.mxu0 0.0
    %156 = vmatpush2.msra.mxu0 0.0
    %157 = vmatprep.subr.mxu0 0.0
    %158 = vmatpush2.msra.mxu0 0.0
    %159 = vmatprep.subr.mxu0 0.0
    %160 = vmatpush2.msra.mxu0 0.0
    %161 = vmatprep.subr.mxu0 0.0
    %162 = vmatpush2.msra.mxu0 0.0
    %163 = vmatprep.subr.mxu0 0.0
    %164 = vmatpush2.msra.mxu0 0.0
    %165 = vmatprep.subr.mxu0 0.0
    %166 = vmatpush2.msra.mxu0 0.0
    %167 = vmatprep.subr.mxu0 0.0
    %168 = vmatpush2.msra.mxu0 0.0
    %169 = vmatprep.subr.mxu0 0.0
    %170 = vmatpush2.msra.mxu0 0.0
    %171 = vmatprep.subr.mxu0 0.0
    %172 = vmatpush2.msra.mxu0 0.0
    %173 = vmatprep.subr.mxu0 0.0
    %174 = vmatpush2.msra.mxu0 0.0
    %175 = vmatprep.subr.mxu0 0.0
    %176 = vmatpush2.msra.mxu0 0.0
    %177 = vmatprep.mubr.f32.mxu0 0.0
    %178 = vmatmul.mubr.f32.gmra.mxu0 %v111
    %v179 = vpop.f32.mrf.mxu0
    %v180 = vadd.f32 %v107, %v179
    %v181 = vpop.f32.mrf.mxu0
    %182 = vdwg.mxu0
    %v183 = vmax.f32 %v180, 0.0
    %v184 = vld [vmem:[#allocation7] sm:$0xff]
    %v185 = vld [vmem:[#allocation7 + $0x8] sm:$0xff]
    %v186 = vld [vmem:[#allocation7 + $0x10] sm:$0xff]
    %v187 = vld [vmem:[#allocation7 + $0x18] sm:$0xff]
    %v188 = vld [vmem:[#allocation7 + $0x20] sm:$0xff]
    %v189 = vld [vmem:[#allocation7 + $0x28] sm:$0xff]
    %v190 = vld [vmem:[#allocation7 + $0x30] sm:$0xff]
    %v191 = vld [vmem:[#allocation7 + $0x38] sm:$0xff]
    %v192 = vld [vmem:[#allocation7 + $0x40] sm:$0xff]
    %v193 = vld [vmem:[#allocation7 + $0x48] sm:$0xff]
    %v194 = vld [vmem:[#allocation7 + $0x50] sm:$0xff]
    %v195 = vld [vmem:[#allocation7 + $0x58] sm:$0xff]
    %v196 = vld [vmem:[#allocation7 + $0x60] sm:$0xff]
    %v197 = vld [vmem:[#allocation7 + $0x68] sm:$0xff]
    %v198 = vld [vmem:[#allocation7 + $0x70] sm:$0xff]
    %v199 = vld [vmem:[#allocation7 + $0x78] sm:$0xff]
    %v200 = vld [vmem:[%s4] sm:$0x1]
    %v202 = vlaneseq
    %v203 = vshrl.u32 %v202, 7
    %v204 = vsub.s32 0, %v203
    %v205 = vrot.slane %v200, %v204
    %207 = vmatprep.subr.mxu0 0.0
    %208 = vmatpush1.msra.mxu0 %v199
    %209 = vmatprep.subr.mxu0 0.0
    %210 = vmatpush1.msra.mxu0 %v198
    %211 = vmatprep.subr.mxu0 0.0
    %212 = vmatpush1.msra.mxu0 %v197
    %213 = vmatprep.subr.mxu0 0.0
    %214 = vmatpush1.msra.mxu0 %v196
    %215 = vmatprep.subr.mxu0 0.0
    %216 = vmatpush1.msra.mxu0 %v195
    %217 = vmatprep.subr.mxu0 0.0
    %218 = vmatpush1.msra.mxu0 %v194
    %219 = vmatprep.subr.mxu0 0.0
    %220 = vmatpush1.msra.mxu0 %v193
    %221 = vmatprep.subr.mxu0 0.0
    %222 = vmatpush1.msra.mxu0 %v192
    %223 = vmatprep.subr.mxu0 0.0
    %224 = vmatpush1.msra.mxu0 %v191
    %225 = vmatprep.subr.mxu0 0.0
    %226 = vmatpush1.msra.mxu0 %v190
    %227 = vmatprep.subr.mxu0 0.0
    %228 = vmatpush1.msra.mxu0 %v189
    %229 = vmatprep.subr.mxu0 0.0
    %230 = vmatpush1.msra.mxu0 %v188
    %231 = vmatprep.subr.mxu0 0.0
    %232 = vmatpush1.msra.mxu0 %v187
    %233 = vmatprep.subr.mxu0 0.0
    %234 = vmatpush1.msra.mxu0 %v186
    %235 = vmatprep.subr.mxu0 0.0
    %236 = vmatpush1.msra.mxu0 %v185
    %237 = vmatprep.subr.mxu0 0.0
    %238 = vmatpush1.msra.mxu0 %v184
    %239 = vmatprep.subr.mxu0 0.0
    %240 = vmatpush2.msra.mxu0 0.0
    %241 = vmatprep.subr.mxu0 0.0
    %242 = vmatpush2.msra.mxu0 0.0
    %243 = vmatprep.subr.mxu0 0.0
    %244 = vmatpush2.msra.mxu0 0.0
    %245 = vmatprep.subr.mxu0 0.0
    %246 = vmatpush2.msra.mxu0 0.0
    %247 = vmatprep.subr.mxu0 0.0
    %248 = vmatpush2.msra.mxu0 0.0
    %249 = vmatprep.subr.mxu0 0.0
    %250 = vmatpush2.msra.mxu0 0.0
    %251 = vmatprep.subr.mxu0 0.0
    %252 = vmatpush2.msra.mxu0 0.0
    %253 = vmatprep.subr.mxu0 0.0
    %254 = vmatpush2.msra.mxu0 0.0
    %255 = vmatprep.subr.mxu0 0.0
    %256 = vmatpush2.msra.mxu0 0.0
    %257 = vmatprep.subr.mxu0 0.0
    %258 = vmatpush2.msra.mxu0 0.0
    %259 = vmatprep.subr.mxu0 0.0
    %260 = vmatpush2.msra.mxu0 0.0
    %261 = vmatprep.subr.mxu0 0.0
    %262 = vmatpush2.msra.mxu0 0.0
    %263 = vmatprep.subr.mxu0 0.0
    %264 = vmatpush2.msra.mxu0 0.0
    %265 = vmatprep.subr.mxu0 0.0
    %266 = vmatpush2.msra.mxu0 0.0
    %267 = vmatprep.subr.mxu0 0.0
    %268 = vmatpush2.msra.mxu0 0.0
    %269 = vmatprep.subr.mxu0 0.0
    %270 = vmatpush2.msra.mxu0 0.0
    %271 = vmatprep.mubr.f32.mxu0 0.0
    %272 = vmatmul.mubr.f32.gmra.mxu0 %v183
    %v273 = vpop.f32.mrf.mxu0
    %v274 = vadd.f32 %v205, %v273
    %v275 = vpop.f32.mrf.mxu0
    %276 = vdwg.mxu0
    %v277 = vld [vmem:[#allocation8] sm:$0xff]
    %v278 = vld [vmem:[#allocation8 + $0x8] sm:$0xff]
    %v279 = vld [vmem:[#allocation8 + $0x10] sm:$0xff]
    %v280 = vld [vmem:[#allocation8 + $0x18] sm:$0xff]
    %v281 = vld [vmem:[#allocation8 + $0x20] sm:$0xff]
    %v282 = vld [vmem:[#allocation8 + $0x28] sm:$0xff]
    %v283 = vld [vmem:[#allocation8 + $0x30] sm:$0xff]
    %v284 = vld [vmem:[#allocation8 + $0x38] sm:$0xff]
    %v285 = vld [vmem:[#allocation8 + $0x40] sm:$0xff]
    %v286 = vld [vmem:[#allocation8 + $0x48] sm:$0xff]
    %v287 = vld [vmem:[#allocation8 + $0x50] sm:$0xff]
    %v288 = vld [vmem:[#allocation8 + $0x58] sm:$0xff]
    %v289 = vld [vmem:[#allocation8 + $0x60] sm:$0xff]
    %v290 = vld [vmem:[#allocation8 + $0x68] sm:$0xff]
    %v291 = vld [vmem:[#allocation8 + $0x70] sm:$0xff]
    %v292 = vld [vmem:[#allocation8 + $0x78] sm:$0xff]
    %v293 = vld [vmem:[%s6] sm:$0x1]
    %v295 = vlaneseq
    %v296 = vshrl.u32 %v295, 7
    %v297 = vsub.s32 0, %v296
    %v298 = vrot.slane %v293, %v297
    %300 = vmatprep.subr.mxu0 0.0
    %301 = vmatpush1.msra.mxu0 %v292
    %302 = vmatprep.subr.mxu0 0.0
    %303 = vmatpush1.msra.mxu0 %v291
    %304 = vmatprep.subr.mxu0 0.0
    %305 = vmatpush1.msra.mxu0 %v290
    %306 = vmatprep.subr.mxu0 0.0
    %307 = vmatpush1.msra.mxu0 %v289
    %308 = vmatprep.subr.mxu0 0.0
    %309 = vmatpush1.msra.mxu0 %v288
    %310 = vmatprep.subr.mxu0 0.0
    %311 = vmatpush1.msra.mxu0 %v287
    %312 = vmatprep.subr.mxu0 0.0
    %313 = vmatpush1.msra.mxu0 %v286
    %314 = vmatprep.subr.mxu0 0.0
    %315 = vmatpush1.msra.mxu0 %v285
    %316 = vmatprep.subr.mxu0 0.0
    %317 = vmatpush1.msra.mxu0 %v284
    %318 = vmatprep.subr.mxu0 0.0
    %319 = vmatpush1.msra.mxu0 %v283
    %320 = vmatprep.subr.mxu0 0.0
    %321 = vmatpush1.msra.mxu0 %v282
    %322 = vmatprep.subr.mxu0 0.0
    %323 = vmatpush1.msra.mxu0 %v281
    %324 = vmatprep.subr.mxu0 0.0
    %325 = vmatpush1.msra.mxu0 %v280
    %326 = vmatprep.subr.mxu0 0.0
    %327 = vmatpush1.msra.mxu0 %v279
    %328 = vmatprep.subr.mxu0 0.0
    %329 = vmatpush1.msra.mxu0 %v278
    %330 = vmatprep.subr.mxu0 0.0
    %331 = vmatpush1.msra.mxu0 %v277
    %332 = vmatprep.subr.mxu0 0.0
    %333 = vmatpush2.msra.mxu0 0.0
    %334 = vmatprep.subr.mxu0 0.0
    %335 = vmatpush2.msra.mxu0 0.0
    %336 = vmatprep.subr.mxu0 0.0
    %337 = vmatpush2.msra.mxu0 0.0
    %338 = vmatprep.subr.mxu0 0.0
    %339 = vmatpush2.msra.mxu0 0.0
    %340 = vmatprep.subr.mxu0 0.0
    %341 = vmatpush2.msra.mxu0 0.0
    %342 = vmatprep.subr.mxu0 0.0
    %343 = vmatpush2.msra.mxu0 0.0
    %344 = vmatprep.subr.mxu0 0.0
    %345 = vmatpush2.msra.mxu0 0.0
    %346 = vmatprep.subr.mxu0 0.0
    %347 = vmatpush2.msra.mxu0 0.0
    %348 = vmatprep.subr.mxu0 0.0
    %349 = vmatpush2.msra.mxu0 0.0
    %350 = vmatprep.subr.mxu0 0.0
    %351 = vmatpush2.msra.mxu0 0.0
    %352 = vmatprep.subr.mxu0 0.0
    %353 = vmatpush2.msra.mxu0 0.0
    %354 = vmatprep.subr.mxu0 0.0
    %355 = vmatpush2.msra.mxu0 0.0
    %356 = vmatprep.subr.mxu0 0.0
    %357 = vmatpush2.msra.mxu0 0.0
    %358 = vmatprep.subr.mxu0 0.0
    %359 = vmatpush2.msra.mxu0 0.0
    %360 = vmatprep.subr.mxu0 0.0
    %361 = vmatpush2.msra.mxu0 0.0
    %362 = vmatprep.subr.mxu0 0.0
    %363 = vmatpush2.msra.mxu0 0.0
    %364 = vmatprep.mubr.f32.mxu0 0.0
    %365 = vmatmul.mubr.f32.gmra.mxu0 %v274
    %v366 = vpop.f32.mrf.mxu0
    %v367 = vadd.f32 %v298, %v366
    %v368 = vpop.f32.mrf.mxu0
    %369 = vdwg.mxu0
    %v370 = vmax.f32 %v367, 0.0
    %v371 = vld [vmem:[#allocation10] sm:$0xff]
    %v372 = vld [vmem:[#allocation10 + $0x8] sm:$0xff]
    %v373 = vld [vmem:[#allocation10 + $0x10] sm:$0xff]
    %v374 = vld [vmem:[#allocation10 + $0x18] sm:$0xff]
    %v375 = vld [vmem:[#allocation10 + $0x20] sm:$0xff]
    %v376 = vld [vmem:[#allocation10 + $0x28] sm:$0xff]
    %v377 = vld [vmem:[#allocation10 + $0x30] sm:$0xff]
    %v378 = vld [vmem:[#allocation10 + $0x38] sm:$0xff]
    %v379 = vld [vmem:[#allocation10 + $0x40] sm:$0xff]
    %v380 = vld [vmem:[#allocation10 + $0x48] sm:$0xff]
    %v381 = vld [vmem:[#allocation10 + $0x50] sm:$0xff]
    %v382 = vld [vmem:[#allocation10 + $0x58] sm:$0xff]
    %v383 = vld [vmem:[#allocation10 + $0x60] sm:$0xff]
    %v384 = vld [vmem:[#allocation10 + $0x68] sm:$0xff]
    %v385 = vld [vmem:[#allocation10 + $0x70] sm:$0xff]
    %v386 = vld [vmem:[#allocation10 + $0x78] sm:$0xff]
    %v387 = vld [vmem:[%s8] sm:$0x1]
    %v389 = vlaneseq
    %v390 = vshrl.u32 %v389, 7
    %v391 = vsub.s32 0, %v390
    %v392 = vrot.slane %v387, %v391
    %394 = vmatprep.subr.mxu0 0.0
    %395 = vmatpush1.msra.mxu0 %v386
    %396 = vmatprep.subr.mxu0 0.0
    %397 = vmatpush1.msra.mxu0 %v385
    %398 = vmatprep.subr.mxu0 0.0
    %399 = vmatpush1.msra.mxu0 %v384
    %400 = vmatprep.subr.mxu0 0.0
    %401 = vmatpush1.msra.mxu0 %v383
    %402 = vmatprep.subr.mxu0 0.0
    %403 = vmatpush1.msra.mxu0 %v382
    %404 = vmatprep.subr.mxu0 0.0
    %405 = vmatpush1.msra.mxu0 %v381
    %406 = vmatprep.subr.mxu0 0.0
    %407 = vmatpush1.msra.mxu0 %v380
    %408 = vmatprep.subr.mxu0 0.0
    %409 = vmatpush1.msra.mxu0 %v379
    %410 = vmatprep.subr.mxu0 0.0
    %411 = vmatpush1.msra.mxu0 %v378
    %412 = vmatprep.subr.mxu0 0.0
    %413 = vmatpush1.msra.mxu0 %v377
    %414 = vmatprep.subr.mxu0 0.0
    %415 = vmatpush1.msra.mxu0 %v376
    %416 = vmatprep.subr.mxu0 0.0
    %417 = vmatpush1.msra.mxu0 %v375
    %418 = vmatprep.subr.mxu0 0.0
    %419 = vmatpush1.msra.mxu0 %v374
    %420 = vmatprep.subr.mxu0 0.0
    %421 = vmatpush1.msra.mxu0 %v373
    %422 = vmatprep.subr.mxu0 0.0
    %423 = vmatpush1.msra.mxu0 %v372
    %424 = vmatprep.subr.mxu0 0.0
    %425 = vmatpush1.msra.mxu0 %v371
    %426 = vmatprep.subr.mxu0 0.0
    %427 = vmatpush2.msra.mxu0 0.0
    %428 = vmatprep.subr.mxu0 0.0
    %429 = vmatpush2.msra.mxu0 0.0
    %430 = vmatprep.subr.mxu0 0.0
    %431 = vmatpush2.msra.mxu0 0.0
    %432 = vmatprep.subr.mxu0 0.0
    %433 = vmatpush2.msra.mxu0 0.0
    %434 = vmatprep.subr.mxu0 0.0
    %435 = vmatpush2.msra.mxu0 0.0
    %436 = vmatprep.subr.mxu0 0.0
    %437 = vmatpush2.msra.mxu0 0.0
    %438 = vmatprep.subr.mxu0 0.0
    %439 = vmatpush2.msra.mxu0 0.0
    %440 = vmatprep.subr.mxu0 0.0
    %441 = vmatpush2.msra.mxu0 0.0
    %442 = vmatprep.subr.mxu0 0.0
    %443 = vmatpush2.msra.mxu0 0.0
    %444 = vmatprep.subr.mxu0 0.0
    %445 = vmatpush2.msra.mxu0 0.0
    %446 = vmatprep.subr.mxu0 0.0
    %447 = vmatpush2.msra.mxu0 0.0
    %448 = vmatprep.subr.mxu0 0.0
    %449 = vmatpush2.msra.mxu0 0.0
    %450 = vmatprep.subr.mxu0 0.0
    %451 = vmatpush2.msra.mxu0 0.0
    %452 = vmatprep.subr.mxu0 0.0
    %453 = vmatpush2.msra.mxu0 0.0
    %454 = vmatprep.subr.mxu0 0.0
    %455 = vmatpush2.msra.mxu0 0.0
    %456 = vmatprep.subr.mxu0 0.0
    %457 = vmatpush2.msra.mxu0 0.0
    %458 = vmatprep.mubr.f32.mxu0 0.0
    %459 = vmatmul.mubr.f32.gmra.mxu0 %v370
    %v460 = vpop.f32.mrf.mxu0
    %v461 = vadd.f32 %v392, %v460
    %v462 = vpop.f32.mrf.mxu0
    %463 = vdwg.mxu0
    %464 = vst [vmem:[#allocation11] sm:$0xff] %v461
    // Predicated region
    $region58: #{tpu_custom_call.1} parent=1 // pred_check
      _
    $region59: #{tpu_custom_call.1} parent=1 // pred_check_branch
      %466 = sbr.rel (0) target = $region61
    $region60: #{tpu_custom_call.1} parent=1 // pred_region
      %s468 = ssub.s32 128, 128
      %469 = vsyncadd [#allocation4], %s468
      %s471 = sshll.u32 [#allocation11], 4
      %s472 = int_to_ptr.vmem [resolvable:$true] %s471
      %474 = dma.vmem_to_hbm [thread:$0]  %s472, 128, %s9, [#allocation4]
    $region61: #{tpu_custom_call.1} parent=1 // pred_fallthru
      _
    // Predicated region
    $region62: #{tpu_custom_call.1} parent=1 // pred_check
      _
    $region63: #{tpu_custom_call.1} parent=1 // pred_check_branch
      %476 = sbr.rel (0) target = $region65
    $region64: #{tpu_custom_call.1} parent=1 // pred_region
      %477 = dma.done [#allocation4], 128
    $region65: #{tpu_custom_call.1} parent=1 // pred_fallthru
      _
    %478 = vsyncpa [#allocation3], 1
    %479 = vsyncpa [#allocation6], 1
    %480 = vsyncpa [#allocation9], 1
    %481 = vsyncpa [#allocation4], 1

</llo_original>
